<compile_context>
chip_gen: v5e
topology: v5e:2x2
jax: 0.10.0
libtpu: 0.0.40
codegen_flags: <defaults>
</compile_context>

<pallas_src>
import jax
import jax.numpy as jnp
from jax import lax
from jax.experimental import pallas as pl
from jax.experimental.pallas import tpu as pltpu


# ---------------------------------------------------------------------------
# Weight construction (plain-JAX glue, traced/folded at compile time)
# ---------------------------------------------------------------------------
def bilinear_resize_matrix(in_size: int, out_size: int) -> jnp.ndarray:
    """(out_size, in_size) matrix reproducing torch bilinear resize,
    align_corners=False, antialias=False."""
    scale = in_size / out_size
    dst = jnp.arange(out_size, dtype=jnp.float32)
    src = (dst + 0.5) * scale - 0.5
    src = jnp.clip(src, 0.0, float(in_size - 1))
    x0 = jnp.floor(src)
    lam = src - x0
    x0i = x0.astype(jnp.int32)
    x1i = jnp.minimum(x0i + 1, in_size - 1)
    rows = jnp.arange(out_size)
    w = jnp.zeros((out_size, in_size), jnp.float32)
    w = w.at[rows, x0i].add(1.0 - lam)
    w = w.at[rows, x1i].add(lam)
    return w


def center_crop_offsets(resize_hw, crop_hw):
    rh, rw = resize_hw
    ch, cw = crop_hw
    top = int(round((rh - ch) / 2.0))
    left = int(round((rw - cw) / 2.0))
    return top, left


def _vmem_capacity_bytes(default=64 * 1024 * 1024):
    """Physical per-core VMEM; falls back to the smallest (v7x) if unknown."""
    try:
        return int(pltpu.get_tpu_info().vmem_capacity_bytes)
    except Exception:
        return default


def _pick_block_t(T, H, WC, C, ch, cw, cdt_size, out_size, vmem_budget,
                  min_steps=4):
    """Largest divisor of T that (a) fits the VMEM budget with honest
    accounting of blocks, weights and per-frame temporaries and (b) leaves the
    grid with at least `min_steps` steps (both v7x cores used, pipelining)."""
    X = C * cw
    per_frame = (2 * H * WC                      # uint8 input block, dbl-buffered
                 + 2 * C * ch * cw * out_size)   # output block, dbl-buffered
    fixed = 2 * (WC * X + ch * H) * cdt_size     # weights, dbl-buffered
    live = (H * WC * cdt_size                    # one frame's cast image
            + H * X * (4 + cdt_size)             # mid (f32 acc + compute copy)
            + 2 * ch * X * 4)                    # res + epilogue slack
    cap_v = (vmem_budget - fixed - live) // max(per_frame, 1)
    cap_s = max(1, T // min_steps)
    cap = max(1, min(cap_v, cap_s))
    bt = 1
    for d in range(1, T + 1):
        if T % d == 0 and d <= cap:
            bt = d
    return bt


# ---------------------------------------------------------------------------
# Pallas kernel: one block of `block_t` frames per grid step
# ---------------------------------------------------------------------------
def _make_kernel(C, block_t, cw, biases, compute_dtype):
    def kernel(img_ref, wbig_ref, wh_ref, out_ref):
        # img_ref : (block_t, H, W*C) uint8
        # wbig_ref: (W*C, C*cw)  block-diagonal width weights (scale folded in)
        # wh_ref  : (ch, H)      shared height weights (unscaled)
        # out_ref : (C, block_t, ch, cw)
        def body(t, carry):
            # Direct uint8 -> compute dtype cast (no int32 hop); /255 and the
            # per-channel 1/std live in wbig's columns.
            img = img_ref[t].astype(compute_dtype)                    # (H, W*C)
            # Width resize + channel de-interleave in ONE MXU matmul.
            mid = jnp.dot(img, wbig_ref[...],
                          preferred_element_type=jnp.float32)         # (H, C*cw)
            mid = mid.astype(compute_dtype)
            # Height resize with a single shared weight (no broadcast copies).
            res = jnp.dot(wh_ref[...], mid,
                          preferred_element_type=jnp.float32)         # (ch, C*cw)
            # Per-channel scalar bias epilogue + store straight into the final
            # (C, T, ch, cw) layout via static lane slices (no wrapper transpose).
            for c in range(C):
                out_ref[c, t] = (res[:, c * cw:(c + 1) * cw]
                                 + biases[c]).astype(out_ref.dtype)
            return carry

        lax.fori_loop(0, block_t, body, 0)

    return kernel


def kinect400_eval(vid_u8, crop_size, resize_size,
                   mean=(0.43216, 0.394666, 0.37645),
                   std=(0.22803, 0.22145, 0.216989),
                   block_t=None, compute_dtype=jnp.float32,
                   out_dtype=jnp.float32):
    """vid_u8: (T, H, W, C) uint8 -> (C, T, crop_h, crop_w) out_dtype.

    compute_dtype=jnp.bfloat16 is recommended on v6e/v7x (MXU operands only;
    accumulation and the bias epilogue stay f32)."""
    T, H, W, C = vid_u8.shape
    ch, cw = crop_size
    rh, rw = resize_size
    WC = W * C
    X = C * cw

    # Interpolation matrices with center-crop folded in by row/col selection.
    wh_full = bilinear_resize_matrix(H, rh)                          # (rh, H)
    ww_full = bilinear_resize_matrix(W, rw)                          # (rw, W)
    top, left = center_crop_offsets((rh, rw), (ch, cw))
    wh = wh_full[top:top + ch, :]                                    # (ch, H), unscaled
    wwt = ww_full[left:left + cw, :].T                               # (W, cw)

    mean = [float(m) for m in mean]
    std = [float(s) for s in std]
    # Block-diagonal width/channel weight: rows are the (w, c) interleave of
    # the flattened input minor dims, columns are channel-major crop columns.
    # The uint8->float /255 and the per-channel 1/std are folded in here.
    wbig = jnp.zeros((WC, X), jnp.float32)
    for c in range(C):
        wbig = wbig.at[c::C, c * cw:(c + 1) * cw].set(wwt / (255.0 * std[c]))
    biases = tuple(-m / s for m, s in zip(mean, std))                # compile-time consts

    wbig = wbig.astype(compute_dtype)
    wh = wh.astype(compute_dtype)

    # VMEM-aware frame-block size and compiler VMEM limit (per generation).
    phys_vmem = _vmem_capacity_bytes()
    vmem_limit = min((phys_vmem * 3) // 4, 112 * 1024 * 1024)        # 48 MiB on v7x
    if block_t is None:
        block_t = _pick_block_t(
            T, H, WC, C, ch, cw,
            jnp.dtype(compute_dtype).itemsize, jnp.dtype(out_dtype).itemsize,
            vmem_budget=int(phys_vmem * 0.35))
    assert T % block_t == 0, "block_t must divide T"

    # Free row-major merge of the minor dims: no transpose, no extra HBM pass.
    x = vid_u8.reshape(T, H, WC)

    kernel = _make_kernel(C, block_t, cw, biases, compute_dtype)
    out = pl.pallas_call(
        kernel,
        out_shape=jax.ShapeDtypeStruct((C, T, ch, cw), out_dtype),
        grid=(T // block_t,),
        in_specs=[
            pl.BlockSpec((block_t, H, WC), lambda i: (i, 0, 0)),     # video (u8)
            pl.BlockSpec((WC, X), lambda i: (0, 0)),                 # Wbig
            pl.BlockSpec((ch, H), lambda i: (0, 0)),                 # Wh (shared)
        ],
        out_specs=pl.BlockSpec((C, block_t, ch, cw), lambda i: (0, i, 0, 0)),
        compiler_params=pltpu.CompilerParams(
            dimension_semantics=("parallel",),
            vmem_limit_bytes=int(vmem_limit)),
    )(x, wbig, wh)
    return out


# ---------------------------------------------------------------------------
# Pure-JAX reference (for verification)
# ---------------------------------------------------------------------------
def kinect400_eval_ref(vid_u8, crop_size, resize_size,
                       mean=(0.43216, 0.394666, 0.37645),
                       std=(0.22803, 0.22145, 0.216989)):
    T, H, W, C = vid_u8.shape
    ch, cw = crop_size
    rh, rw = resize_size
    wh_full = bilinear_resize_matrix(H, rh)
    ww_full = bilinear_resize_matrix(W, rw)
    top, left = center_crop_offsets((rh, rw), (ch, cw))

    x = jnp.transpose(vid_u8, (0, 3, 1, 2)).astype(jnp.float32)      # (T, C, H, W)
    resized = jnp.einsum("oh,tchw,qw->tcoq", wh_full, x, ww_full)
    cropped = resized[:, :, top:top + ch, left:left + cw]
    mean = jnp.asarray(mean, jnp.float32).reshape(1, C, 1, 1)
    std = jnp.asarray(std, jnp.float32).reshape(1, C, 1, 1)
    normed = (cropped / 255.0 - mean) / std
    return jnp.transpose(normed, (1, 0, 2, 3))                       # (C, T, ch, cw)


if __name__ == "__main__":
    T, H, W, C = 4, 16, 16, 3
    resize_size = (12, 12)
    crop_size = (8, 8)

    key = jax.random.PRNGKey(0)
    vid = jax.random.randint(key, (T, H, W, C), 0, 256, dtype=jnp.int32)
    vid = vid.astype(jnp.uint8)

    ref = kinect400_eval_ref(vid, crop_size, resize_size)

    # f32 compute path (auto block_t -> 4 grid steps, exercising the pipeline).
    run_f32 = jax.jit(lambda v: kinect400_eval(v, crop_size, resize_size))
    out = jax.block_until_ready(run_f32(vid))
    assert out.shape == (C, T, crop_size[0], crop_size[1])
    assert out.dtype == jnp.float32
    assert jnp.allclose(out, ref, atol=1e-4, rtol=1e-4)

    # bf16 MXU-operand path (production default on v6e/v7x); looser tolerance
    # because the interpolation weights are quantized to bf16.
    run_bf16 = jax.jit(lambda v: kinect400_eval(v, crop_size, resize_size,
                                                compute_dtype=jnp.bfloat16))
    out_bf16 = jax.block_until_ready(run_bf16(vid))
    assert out_bf16.dtype == jnp.float32
    assert jnp.allclose(out_bf16, ref, atol=1e-1, rtol=1e-1)

    print("KERNEL_OK")
</pallas_src>

<mosaic_0001>
module attributes {stable_mosaic.version = 11 : i64} {
  func.func @kernel(%arg0: i32, %arg1: memref<1x16x48xi8, #tpu.memory_space<vmem>>, %arg2: memref<48x24xf32, #tpu.memory_space<vmem>>, %arg3: memref<8x16xf32, #tpu.memory_space<vmem>>, %arg4: memref<3x1x8x8xf32, #tpu.memory_space<vmem>>) attributes {dimension_semantics = [#tpu.dimension_semantics<parallel>], iteration_bounds = array<i64: 4>, scalar_prefetch = 0 : i64, scratch_operands = 0 : i64, tpu.core_type = #tpu.core_type<tc>, window_params = [{transform_indices = @transform_0, window_bounds = array<i64: 1, 16, 48>}, {pipeline_mode = #tpu.pipeline_mode<synchronous>, transform_indices = @transform_1, window_bounds = array<i64: 48, 24>}, {pipeline_mode = #tpu.pipeline_mode<synchronous>, transform_indices = @transform_2, window_bounds = array<i64: 8, 16>}, {transform_indices = @transform_3, window_bounds = array<i64: 3, 1, 8, 8>}]} {
    %c0_i32 = arith.constant 0 : i32
    %0 = arith.index_cast %c0_i32 : i32 to index
    %c0 = arith.constant 0 : index
    %c0_0 = arith.constant 0 : index
    %1 = vector.load %arg1[%0, %c0, %c0_0] : memref<1x16x48xi8, #tpu.memory_space<vmem>>, vector<1x16x48xi8>
    %2 = vector.shape_cast %1 : vector<1x16x48xi8> to vector<16x48xi8>
    %3 = arith.uitofp %2 : vector<16x48xi8> to vector<16x48xf32>
    %c0_1 = arith.constant 0 : index
    %c0_2 = arith.constant 0 : index
    %4 = vector.load %arg2[%c0_1, %c0_2] : memref<48x24xf32, #tpu.memory_space<vmem>>, vector<48x24xf32>
    %cst = arith.constant dense<0.000000e+00> : vector<16x24xf32>
    %5 = tpu.matmul %3, %4, %cst {dimension_numbers = #tpu.dot_dimension_numbers<[1], [0], [0], [1], [0, 0, 1, 1], [], []>} : vector<16x48xf32>, vector<48x24xf32>, vector<16x24xf32> -> vector<16x24xf32>
    %c0_3 = arith.constant 0 : index
    %c0_4 = arith.constant 0 : index
    %6 = vector.load %arg3[%c0_3, %c0_4] : memref<8x16xf32, #tpu.memory_space<vmem>>, vector<8x16xf32>
    %cst_5 = arith.constant dense<0.000000e+00> : vector<8x24xf32>
    %7 = tpu.matmul %6, %5, %cst_5 {dimension_numbers = #tpu.dot_dimension_numbers<[1], [0], [0], [1], [0, 0, 1, 1], [], []>} : vector<8x16xf32>, vector<16x24xf32>, vector<8x24xf32> -> vector<8x24xf32>
    %8 = vector.extract_strided_slice %7 {offsets = [0, 0], sizes = [8, 8], strides = [1, 1]} : vector<8x24xf32> to vector<8x8xf32>
    %cst_6 = arith.constant -1.89518929 : f32
    %9 = vector.broadcast %cst_6 : f32 to vector<8x8xf32>
    %10 = arith.addf %8, %9 : vector<8x8xf32>
    %c0_7 = arith.constant 0 : index
    %11 = arith.index_cast %c0_i32 : i32 to index
    %c0_8 = arith.constant 0 : index
    %c0_9 = arith.constant 0 : index
    %12 = vector.load %arg4[%c0_7, %11, %c0_8, %c0_9] : memref<3x1x8x8xf32, #tpu.memory_space<vmem>>, vector<1x1x8x8xf32>
    %13 = vector.shape_cast %12 : vector<1x1x8x8xf32> to vector<8x8xf32>
    %14 = vector.shape_cast %10 : vector<8x8xf32> to vector<1x1x8x8xf32>
    tpu.vector_store %arg4[%c0_7, %11, %c0_8, %c0_9], %14 {strides = array<i32>} : memref<3x1x8x8xf32, #tpu.memory_space<vmem>>, vector<1x1x8x8xf32>,
    %15 = vector.extract_strided_slice %7 {offsets = [0, 8], sizes = [8, 8], strides = [1, 1]} : vector<8x24xf32> to vector<8x8xf32>
    %cst_10 = arith.constant -1.78219008 : f32
    %16 = vector.broadcast %cst_10 : f32 to vector<8x8xf32>
    %17 = arith.addf %15, %16 : vector<8x8xf32>
    %c1 = arith.constant 1 : index
    %18 = arith.index_cast %c0_i32 : i32 to index
    %c0_11 = arith.constant 0 : index
    %c0_12 = arith.constant 0 : index
    %19 = vector.load %arg4[%c1, %18, %c0_11, %c0_12] : memref<3x1x8x8xf32, #tpu.memory_space<vmem>>, vector<1x1x8x8xf32>
    %20 = vector.shape_cast %19 : vector<1x1x8x8xf32> to vector<8x8xf32>
    %21 = vector.shape_cast %17 : vector<8x8xf32> to vector<1x1x8x8xf32>
    tpu.vector_store %arg4[%c1, %18, %c0_11, %c0_12], %21 {strides = array<i32>} : memref<3x1x8x8xf32, #tpu.memory_space<vmem>>, vector<1x1x8x8xf32>,
    %22 = vector.extract_strided_slice %7 {offsets = [0, 16], sizes = [8, 8], strides = [1, 1]} : vector<8x24xf32> to vector<8x8xf32>
    %cst_13 = arith.constant -1.73488057 : f32
    %23 = vector.broadcast %cst_13 : f32 to vector<8x8xf32>
    %24 = arith.addf %22, %23 : vector<8x8xf32>
    %c2 = arith.constant 2 : index
    %25 = arith.index_cast %c0_i32 : i32 to index
    %c0_14 = arith.constant 0 : index
    %c0_15 = arith.constant 0 : index
    %26 = vector.load %arg4[%c2, %25, %c0_14, %c0_15] : memref<3x1x8x8xf32, #tpu.memory_space<vmem>>, vector<1x1x8x8xf32>
    %27 = vector.shape_cast %26 : vector<1x1x8x8xf32> to vector<8x8xf32>
    %28 = vector.shape_cast %24 : vector<8x8xf32> to vector<1x1x8x8xf32>
    tpu.vector_store %arg4[%c2, %25, %c0_14, %c0_15], %28 {strides = array<i32>} : memref<3x1x8x8xf32, #tpu.memory_space<vmem>>, vector<1x1x8x8xf32>,
    %c1_i32 = arith.constant 1 : i32
    return
  }
  func.func @transform_0(%arg0: i32) -> (i32, i32, i32) {
    %c0_i32 = arith.constant 0 : i32
    %c0_i32_0 = arith.constant 0 : i32
    %c0_i32_1 = arith.constant 0 : i32
    return %arg0, %c0_i32, %c0_i32_0 : i32, i32, i32
  }
  func.func @transform_1(%arg0: i32) -> (i32, i32) {
    %c0_i32 = arith.constant 0 : i32
    %c0_i32_0 = arith.constant 0 : i32
    %c0_i32_1 = arith.constant 0 : i32
    return %c0_i32, %c0_i32_0 : i32, i32
  }
  func.func @transform_2(%arg0: i32) -> (i32, i32) {
    %c0_i32 = arith.constant 0 : i32
    %c0_i32_0 = arith.constant 0 : i32
    %c0_i32_1 = arith.constant 0 : i32
    return %c0_i32, %c0_i32_0 : i32, i32
  }
  func.func @transform_3(%arg0: i32) -> (i32, i32, i32, i32) {
    %c0_i32 = arith.constant 0 : i32
    %c0_i32_0 = arith.constant 0 : i32
    %c0_i32_1 = arith.constant 0 : i32
    %c0_i32_2 = arith.constant 0 : i32
    return %c0_i32, %arg0, %c0_i32_0, %c0_i32_1 : i32, i32, i32, i32
  }
}

</mosaic_0001>

<llo_original>
// kernel: _lambda_.1
$region0: #{_lambda_.1}
  #allocation0 [shape = 'u32[]', space=smem, size = 0x4, offset = 0x4, fixed_abs, tag = 'smem constant byte address 0x4 - core index']
  #allocation1 [shape = 'u32[72,128]{1,0:T(1,128)}', space=vmem, size = 0x9000, scoped, tag = 'internal scratch']
  %s0 = inlined_call_operand.vmem [shape: u8[4,16,48], index: 0, kind: input, shape index: {}]
  %s1 = inlined_call_operand.vmem [shape: f32[48,24], index: 1, kind: input, shape index: {}]
  %s2 = inlined_call_operand.vmem [shape: f32[8,16], index: 2, kind: input, shape index: {}]
  %s3 = inlined_call_operand.hbm [shape: f32[3,4,8,8], index: 3, kind: output, shape index: {}]
  %s4 = sld [smem:[#allocation0]]
  $region45: #{_lambda_.1} parent=0
    _
  %s6 = ssub.s32 1, %s4
  %s7 = scalar_select 0, %s6, %s4
  $region1: #{_lambda_.1} parent=0
    #allocation2 [shape = 'u8[24576]{0}', space=vmem, size = 0x6000, scoped, tag = 'output window, operand 0']
    #allocation3 [shape = 's32[2]{0}', space=sflag, size = 0x8, scoped, tag = 'scoped memory for _lambda_.1']
    %8 = vsyncpa [#allocation3], 0
    %s9 = scalar_lea.sflag [#allocation3], 1
    %10 = vsyncpa %s9, 0
    loop: start=0, step=1, limit=6
    $region2: #{_lambda_.1} parent=1 // loop_pre_header
      _
    $region3: #{_lambda_.1} parent=1 // loop_header
      %s12 = sphi 0, %s16
      %p13 = scmp.ge.s32.totalorder %s12, 6
      %s22 = sphi 0, %s24
      %s25 = sphi 0, %s22
      %s26 = sphi 0, %s25
      %s42 = sphi 0, %s26
      %s46 = sphi 0, %s46
      %s48 = sphi 0, %s46
      %s49 = sphi 0, %s48
      %s63 = sphi 0, %s49
      %s67 = sphi 0, %s67
      %s69 = sphi 0, %s67
      %s70 = sphi 0, %s69
      %s84 = sphi 0, %s70
      %s90 = sphi 0, %s92
      %s93 = sphi 0, %s90
      %s94 = sphi 0, %s93
      %s110 = sphi 0, %s94
    $region4: #{_lambda_.1} parent=1 // loop_header_branch
      %15 = sbr.rel (%p13) target = $region8
    $region5: #{_lambda_.1} parent=1 // loop_body
      %s17 = ssub.s32 %s12, 1
      %s18 = ssub.s32 %s12, 2
      %s19 = sadd.s32 %s12, 1
      %s20 = ssub.s32 %s12, %s19
      %p21 = scmp.eq.s32.totalorder %s20, 0
      %s23 = sadd.s32 %s22, 1
      %s24 = scalar_select %p21, %s22, %s23
      %p27 = pneg %p21
      %p28 = scmp.eq.s32.totalorder %s12, 3
      %p29 = por %p27, %p28
      %p30 = scmp.ne.s32.totalorder %s22, %s25
      %p31 = scmp.eq.s32.totalorder %s12, 0
      %p32 = por %p30, %p31
      %p33 = scmp.ne.s32.totalorder %s22, %s25
      %p34 = scmp.eq.s32.totalorder %s17, 3
      %p35 = por %p33, %p34
      %p36 = scmp.ne.s32.totalorder %s25, %s26
      %p37 = scmp.eq.s32.totalorder %s17, 0
      %p38 = por %p36, %p37
      %p39 = scmp.ne.s32.totalorder %s25, %s26
      %p40 = scmp.eq.s32.totalorder %s18, 3
      %p41 = por %p39, %p40
      %p43 = scmp.ne.s32.totalorder %s26, %s42
      %p44 = scmp.eq.s32.totalorder %s18, 0
      %p45 = por %p43, %p44
      %s47 = sadd.s32 %s46, 1
      %p50 = scmp.eq.s32.totalorder %s12, 3
      %p51 = scmp.ne.s32.totalorder %s46, %s48
      %p52 = scmp.eq.s32.totalorder %s12, 0
      %p53 = por %p51, %p52
      %p54 = scmp.ne.s32.totalorder %s46, %s48
      %p55 = scmp.eq.s32.totalorder %s17, 3
      %p56 = por %p54, %p55
      %p57 = scmp.ne.s32.totalorder %s48, %s49
      %p58 = scmp.eq.s32.totalorder %s17, 0
      %p59 = por %p57, %p58
      %p60 = scmp.ne.s32.totalorder %s48, %s49
      %p61 = scmp.eq.s32.totalorder %s18, 3
      %p62 = por %p60, %p61
      %p64 = scmp.ne.s32.totalorder %s49, %s63
      %p65 = scmp.eq.s32.totalorder %s18, 0
      %p66 = por %p64, %p65
      %s68 = sadd.s32 %s67, 1
      %p71 = scmp.eq.s32.totalorder %s12, 3
      %p72 = scmp.ne.s32.totalorder %s67, %s69
      %p73 = scmp.eq.s32.totalorder %s12, 0
      %p74 = por %p72, %p73
      %p75 = scmp.ne.s32.totalorder %s67, %s69
      %p76 = scmp.eq.s32.totalorder %s17, 3
      %p77 = por %p75, %p76
      %p78 = scmp.ne.s32.totalorder %s69, %s70
      %p79 = scmp.eq.s32.totalorder %s17, 0
      %p80 = por %p78, %p79
      %p81 = scmp.ne.s32.totalorder %s69, %s70
      %p82 = scmp.eq.s32.totalorder %s18, 3
      %p83 = por %p81, %p82
      %p85 = scmp.ne.s32.totalorder %s70, %s84
      %p86 = scmp.eq.s32.totalorder %s18, 0
      %p87 = por %p85, %p86
      %s88 = ssub.s32 %s12, %s19
      %p89 = scmp.eq.s32.totalorder %s88, 0
      %s91 = sadd.s32 %s90, 1
      %s92 = scalar_select %p89, %s90, %s91
      %p95 = pneg %p89
      %p96 = scmp.eq.s32.totalorder %s12, 3
      %p97 = por %p95, %p96
      %p98 = scmp.ne.s32.totalorder %s90, %s93
      %p99 = scmp.eq.s32.totalorder %s12, 0
      %p100 = por %p98, %p99
      %p101 = scmp.ne.s32.totalorder %s90, %s93
      %p102 = scmp.eq.s32.totalorder %s17, 3
      %p103 = por %p101, %p102
      %p104 = scmp.ne.s32.totalorder %s93, %s94
      %p105 = scmp.eq.s32.totalorder %s17, 0
      %p106 = por %p104, %p105
      %p107 = scmp.ne.s32.totalorder %s93, %s94
      %p108 = scmp.eq.s32.totalorder %s18, 3
      %p109 = por %p107, %p108
      %p111 = scmp.ne.s32.totalorder %s94, %s110
      %p112 = scmp.eq.s32.totalorder %s18, 0
      %p113 = por %p111, %p112
      %p114 = scmp.le.s32.totalorder 1, %s12
      %p115 = scmp.lt.s32.totalorder %s12, 5
      %p116 = pnand %p114, %p115
      %p117 = pneg %p116
      // Predicated region
      $region9: #{_lambda_.1} parent=5 // pred_check
        _
      $region10: #{_lambda_.1} parent=5 // pred_check_branch
        %119 = sbr.rel (%p116) target = $region12
      $region11: #{_lambda_.1} parent=5 // pred_region
        %s120 = ssub.s32 %s12, 1
        // Predicated region
        $region13: #{_lambda_.1} parent=11 // pred_check
          %p121 = pneg %p59
        $region14: #{_lambda_.1} parent=11 // pred_check_branch
          %123 = sbr.rel (%p121) target = $region16
        $region15: #{_lambda_.1} parent=11 // pred_region
          _
        $region16: #{_lambda_.1} parent=11 // pred_fallthru
          _
        // Predicated region
        $region17: #{_lambda_.1} parent=11 // pred_check
          %p124 = pneg %p80
        $region18: #{_lambda_.1} parent=11 // pred_check_branch
          %126 = sbr.rel (%p124) target = $region20
        $region19: #{_lambda_.1} parent=11 // pred_region
          _
        $region20: #{_lambda_.1} parent=11 // pred_fallthru
          _
      $region12: #{_lambda_.1} parent=5 // pred_fallthru
        _
      %p127 = scmp.lt.s32.totalorder %s12, 4
      // Predicated region
      $region21: #{_lambda_.1} parent=5 // pred_check
        %p128 = pneg %p127
      $region22: #{_lambda_.1} parent=5 // pred_check_branch
        %130 = sbr.rel (%p128) target = $region24
      $region23: #{_lambda_.1} parent=5 // pred_region
        // Predicated region
        $region25: #{_lambda_.1} parent=23 // pred_check
          %p131 = pneg %p32
        $region26: #{_lambda_.1} parent=23 // pred_check_branch
          %133 = sbr.rel (%p131) target = $region28
        $region27: #{_lambda_.1} parent=23 // pred_region
          %p134 = scmp.lt.s32.totalorder %s12, 3
          %s135 = scalar_select %p134, %s12, 3
          %s136 = smul.addr %s135, 2
          %s137 = smul.addr %s136, 2
          %s138 = scalar_lea.vmem %s0, %s137
        $region28: #{_lambda_.1} parent=23 // pred_fallthru
          _
      $region24: #{_lambda_.1} parent=5 // pred_fallthru
        _
      %p139 = scmp.le.s32.totalorder 1, %s12
      %p140 = scmp.lt.s32.totalorder %s12, 5
      %p141 = pnand %p139, %p140
      %p142 = pneg %p141
      // Predicated region
      $region29: #{_lambda_.1} parent=5 // pred_check
        _
      $region30: #{_lambda_.1} parent=5 // pred_check_branch
        %144 = sbr.rel (%p141) target = $region32
      $region31: #{_lambda_.1} parent=5 // pred_region
        %s145 = ssub.s32 %s12, 1
        %p146 = scmp.lt.s32.totalorder %s17, 3
        %s147 = scalar_select %p146, %s17, 3
        %s148 = smul.addr %s147, 2
        %s149 = smul.addr %s148, 2
        %s150 = scalar_lea.vmem %s0, %s149
        %p151 = pneg %p38
        %p152 = pneg %p35
        %p153 = pneg %p59
        %p154 = pneg %p56
        %p155 = pneg %p80
        %p156 = pneg %p77
        %p157 = pneg %p106
        %p158 = pneg %p103
        %s159 = sand.u32 %s93, 1
        %s160 = scalar_lea.sflag [#allocation3], %s159
        %s161 = sand.u32 %s93, 1
        %s162 = smul.addr %s161, 24
        %s163 = scalar_lea.vmem [#allocation2], %s162
        %p164 = scmp.lt.s32.totalorder %s17, 3
        %s165 = scalar_select %p164, %s17, 3
        %s166 = smul.addr %s165, 2
        %s167 = smul.addr %s166, 2
        %s168 = scalar_lea.vmem %s0, %s167
        %v169 = vld [vmem:[%s168] sm:$0x3]
        %v170 = vld [vmem:[%s168 + $0x2] sm:$0x3]
        %v171 = vunpack.c.0.s8 %v169
        %v172 = vunpack.c.0.s8 %v170
        %v173 = vand.u32 %v171, 255
        %v174 = vand.u32 %v172, 255
        %v175 = vcvt.s32.f32 %v173
        %v176 = vcvt.s32.f32 %v174
        %v177 = vld [vmem:[%s1] sm:$0xff]
        %v178 = vld [vmem:[%s1 + $0x8] sm:$0xff]
        %v179 = vld [vmem:[%s1 + $0x10] sm:$0xff]
        %v180 = vld [vmem:[%s1 + $0x18] sm:$0xff]
        %v181 = vld [vmem:[%s1 + $0x20] sm:$0xff]
        %v182 = vld [vmem:[%s1 + $0x28] sm:$0xff]
        %vm183 = vcmask 392192
        %v185 = vsel %vm183, %v175, 0
        %v188 = vsel %vm183, %v176, 0
        %190 = vmatpush.msra.mxu0 0.0
        %191 = vmatpush.msra.mxu0 0.0
        %192 = vmatpush.msra.mxu0 0.0
        %193 = vmatpush.msra.mxu0 0.0
        %194 = vmatpush.msra.mxu0 0.0
        %195 = vmatpush.msra.mxu0 0.0
        %196 = vmatpush.msra.mxu0 0.0
        %197 = vmatpush.msra.mxu0 0.0
        %198 = vmatpush.msra.mxu0 0.0
        %199 = vmatpush.msra.mxu0 0.0
        %200 = vmatpush.msra.mxu0 %v182
        %201 = vmatpush.msra.mxu0 %v181
        %202 = vmatpush.msra.mxu0 %v180
        %203 = vmatpush.msra.mxu0 %v179
        %204 = vmatpush.msra.mxu0 %v178
        %205 = vmatpush.msra.mxu0 %v177
        %206 = vmatmul.f32.gmra.mxu0 %v185
        %v207 = vpop.f32.mrf.mxu0
        %v208 = vadd.f32 0.0, %v207
        %209 = vmatmul.f32.gmra.mxu0 %v188
        %v210 = vpop.f32.mrf.mxu0
        %v211 = vadd.f32 0.0, %v210
        %212 = vdwg.mxu0
        %v213 = vld [vmem:[%s2] sm:$0xff]
        %vm214 = vcmask 130048
        %v216 = vsel %vm214, %v213, 0
        %218 = vmatpush.msra.mxu0 0.0
        %219 = vmatpush.msra.mxu0 0.0
        %220 = vmatpush.msra.mxu0 0.0
        %221 = vmatpush.msra.mxu0 0.0
        %222 = vmatpush.msra.mxu0 0.0
        %223 = vmatpush.msra.mxu0 0.0
        %224 = vmatpush.msra.mxu0 0.0
        %225 = vmatpush.msra.mxu0 0.0
        %226 = vmatpush.msra.mxu0 0.0
        %227 = vmatpush.msra.mxu0 0.0
        %228 = vmatpush.msra.mxu0 0.0
        %229 = vmatpush.msra.mxu0 0.0
        %230 = vmatpush.msra.mxu0 0.0
        %231 = vmatpush.msra.mxu0 0.0
        %232 = vmatpush.msra.mxu0 %v211
        %233 = vmatpush.msra.mxu0 %v208
        %234 = vmatmul.f32.gmra.mxu0 %v216
        %v235 = vpop.f32.mrf.mxu0
        %v236 = vadd.f32 0.0, %v235
        %237 = vdwg.mxu0
        %v238 = vadd.f32 %v236, -1.8951893
        %vm239 = vcmask 64512
        %240 = vst.msk [vmem:[%s163] sm:$0xff] %vm239, %v238
        %v241 = vadd.f32 %v236, -1.7821901
        %243 = vrot.lane.b32.xlu0 %v241, 120
        %v244 = vpop.permute.xlu0 %243
        %s246 = scalar_lea.vmem %s163, 8 [#allocation2]
        %247 = vst.msk [vmem:[%s246] sm:$0xff] %vm239, %v244
        %v248 = vadd.f32 %v236, -1.7348806
        %250 = vrot.lane.b32.xlu0 %v248, 112
        %v251 = vpop.permute.xlu0 %250
        %s253 = scalar_lea.vmem %s163, 16 [#allocation2]
        %254 = vst.msk [vmem:[%s253] sm:$0xff] %vm239, %v251
        %s255 = sand.u32 %s93, 1
        %s256 = scalar_lea.sflag [#allocation3], %s255
        %s257 = sand.u32 %s93, 1
        %s258 = smul.addr %s257, 24
        %s259 = scalar_lea.vmem [#allocation2], %s258
        // Predicated region
        $region33: #{_lambda_.1} parent=31 // pred_check
          %p260 = pneg %p103
        $region34: #{_lambda_.1} parent=31 // pred_check_branch
          %262 = sbr.rel (%p260) target = $region36
        $region35: #{_lambda_.1} parent=31 // pred_region
          %264 = vsyncadd %s256, 0
          %s265 = smul.addr %s17, 8
          %s266 = scalar_lea.hbm %s3, %s265
          %s267 = sshll.u32 %s259, 4
          %s268 = int_to_ptr.vmem [resolvable:$true] %s267
          %s269 = sshll.u32 %s266, 4
          %s270 = int_to_ptr.hbm [resolvable:$true] %s269
          %275 = dma.vmem_to_hbm [thread:$0]  %s268, 384, %s270, %s256, 128, 512, 8
        $region36: #{_lambda_.1} parent=31 // pred_fallthru
          _
      $region32: #{_lambda_.1} parent=5 // pred_fallthru
        _
      %p276 = scmp.le.s32.totalorder 2, %s12
      // Predicated region
      $region37: #{_lambda_.1} parent=5 // pred_check
        %p277 = pneg %p276
      $region38: #{_lambda_.1} parent=5 // pred_check_branch
        %279 = sbr.rel (%p277) target = $region40
      $region39: #{_lambda_.1} parent=5 // pred_region
        %s280 = ssub.s32 %s12, 2
        // Predicated region
        $region41: #{_lambda_.1} parent=39 // pred_check
          %p281 = pneg %p109
        $region42: #{_lambda_.1} parent=39 // pred_check_branch
          %283 = sbr.rel (%p281) target = $region44
        $region43: #{_lambda_.1} parent=39 // pred_region
          %s284 = sand.u32 %s94, 1
          %s285 = scalar_lea.sflag [#allocation3], %s284
          %s286 = sand.u32 %s94, 1
          %s287 = smul.addr %s286, 24
          %s288 = scalar_lea.vmem [#allocation2], %s287
          %290 = dma.done %s285, 384
        $region44: #{_lambda_.1} parent=39 // pred_fallthru
          _
      $region40: #{_lambda_.1} parent=5 // pred_fallthru
        _
    $region6: #{_lambda_.1} parent=1 // loop_footer
      %s16 = sadd.s32 1, %s12
    $region7: #{_lambda_.1} parent=1 // loop_footer_branch
      %11 = sbr.rel target = $region3
    $region8: #{_lambda_.1} parent=1 // loop_exit
      _
    %291 = vsyncpa [#allocation3], 1
    %s292 = scalar_lea.sflag [#allocation3], 1
    %293 = vsyncpa %s292, 1

</llo_original>
